<compile_context>
chip_gen: v7x
topology: tpu7x:2x2x1
jax: 0.10.0
libtpu: 0.0.40
codegen_flags: <defaults>
</compile_context>

<pallas_src>
import functools

import jax
import jax.numpy as jnp
import numpy as np
from jax.experimental import pallas as pl
from jax.experimental.pallas import tpu as pltpu

GAMMA = 2
EPS = 1e-7          # kept for parity with the module; unused in forward (as in PyTorch)
_NEG_PAD = -1e30    # pad value for padded class columns (exp underflows to 0)


def _round_up(x, m):
    return -(-x // m) * m


def _focal_kernel(tgt_ref, logits_ref, psum_ref, m_sc, l_sc, sel_sc, *, batch):
    """Online-logsumexp cross entropy over class chunks.

    tgt_ref:    (TB, 1)   int32 hard targets for this batch tile
    logits_ref: (TB, TC)  logits chunk (any float dtype)
    psum_ref:   (1, 8, 128) f32 partial sum of per-sample NLL (lane-dense)
    m_sc / l_sc / sel_sc: (TB, 1) f32 running max / rescaled sum / selected logit
    """
    bi = pl.program_id(0)
    ci = pl.program_id(1)
    nc = pl.num_programs(1)

    chunk = logits_ref[...].astype(jnp.float32)          # (TB, TC) f32
    tgt = tgt_ref[...]                                    # (TB, 1)  int32
    TB, TC = chunk.shape

    @pl.when(ci == 0)
    def _():
        m_sc[...] = jnp.full(m_sc.shape, -jnp.inf, dtype=jnp.float32)
        l_sc[...] = jnp.zeros(l_sc.shape, jnp.float32)
        sel_sc[...] = jnp.zeros(sel_sc.shape, jnp.float32)

    # fused select-reduce (no materialized one-hot): selected logit for this chunk
    col = jax.lax.broadcasted_iota(jnp.int32, (TB, TC), 1) + ci * TC
    sel_sc[...] += jnp.sum(jnp.where(col == tgt, chunk, 0.0), axis=1, keepdims=True)

    # online logsumexp update
    m_prev = m_sc[...]
    m_new = jnp.maximum(m_prev, jnp.max(chunk, axis=1, keepdims=True))
    l_sc[...] = (l_sc[...] * jnp.exp(m_prev - m_new)
                 + jnp.sum(jnp.exp(chunk - m_new), axis=1, keepdims=True))
    m_sc[...] = m_new

    @pl.when(ci == nc - 1)
    def _():
        nll = m_sc[...] + jnp.log(l_sc[...]) - sel_sc[...]          # (TB, 1)
        # mask rows past the true batch size (Pallas-padded last batch tile);
        # jnp.where is a true select, so garbage/NaN rows do not propagate.
        row = jax.lax.broadcasted_iota(jnp.int32, (TB, 1), 0) + bi * TB
        nll = jnp.where(row < batch, nll, 0.0)
        s = jnp.sum(nll)
        psum_ref[...] = jnp.broadcast_to(s.reshape(1, 1, 1), (1, 8, 128))


def _hw_config():
    """Per-generation tile budget / cap / vmem limit. Conservative on unknowns."""
    vmem_cap = None
    try:
        info = pltpu.get_tpu_info()
        cap = int(getattr(info, "vmem_capacity_bytes", 0) or 0)
        vmem_cap = cap if cap > 0 else None
    except Exception:
        vmem_cap = None
    kind = ""
    try:
        kind = jax.devices()[0].device_kind.lower()
    except Exception:
        pass
    is_v7 = "v7" in kind
    big_vmem = (vmem_cap is not None and vmem_cap >= 100 * 1024 * 1024) or (
        vmem_cap is None and not is_v7 and any(g in kind for g in ("v4", "v5", "v6"))
    )
    if big_vmem:
        # v5e / v6e: 128 MiB VMEM, single TensorCore -> big tiles, fewer steps.
        return dict(budget=32 << 20, max_tb=2048, vmem_limit=64 << 20, prefer_two=False)
    # v7x-like (64 MiB VMEM, 2 TCs) or unknown: conservative sizing, split for 2 cores.
    return dict(budget=14 << 20, max_tb=1024, vmem_limit=32 << 20, prefer_two=True)


def _pick_tb(B, tc, in_bytes, budget_bytes, max_tb, prefer_two):
    """Batch tile: multiple of 8, sized so double-buffered input chunk plus the
    in-kernel f32 temporaries (f32 chunk copy, exp temp, select temp) and the
    (m, l, sel) scratch rows fit the budget."""
    per_row = (2 * in_bytes + 3 * 4) * tc + 3 * 4 * 128
    tb = max(8, (budget_bytes // per_row) // 8 * 8)
    b_pad = _round_up(B, 8)
    tb = max(8, min(tb, max_tb, b_pad))
    if prefer_two and B > 8:
        # make sure both TensorCores get a batch tile under "parallel" semantics
        half = _round_up(-(-B // 2), 8)
        if 8 <= half < tb:
            tb = half
    return tb


def focal_loss(labels, gamma=GAMMA):
    """Returns a callable (outputs, index) -> scalar focal loss."""
    labels = jnp.asarray(labels, jnp.float32)
    # Hard targets from the fixed soft-label table, computed once (glue).
    # jnp.argmax matches torch.max(dim=1) first-index tie-breaking.
    tgt_all = jnp.argmax(labels, axis=1).astype(jnp.int32)   # (N,)

    cfg = _hw_config()

    def apply(outputs, index):
        outputs = jnp.asarray(outputs)          # keep native dtype (bf16 OK)
        index = jnp.asarray(index, jnp.int32)
        B, C = outputs.shape

        tgt = tgt_all[index].reshape(B, 1)      # (B, 1) int32 — tiny gather (glue)

        # class-chunk width: multiple of 128, capped at 1024 lanes
        tc = min(1024, _round_up(C, 128))
        Cp = _round_up(C, tc)
        num_c_tiles = Cp // tc
        if Cp != C:
            # pad classes to a multiple of tc so every lane op / DMA is dense;
            # exp(pad - max) underflows to 0 and targets never select pad lanes.
            pad = jnp.full((B, Cp - C), _NEG_PAD, dtype=outputs.dtype)
            outputs = jnp.concatenate([outputs, pad], axis=1)

        in_bytes = jnp.dtype(outputs.dtype).itemsize
        tb = _pick_tb(B, tc, in_bytes, cfg["budget"], cfg["max_tb"], cfg["prefer_two"])
        num_b_tiles = -(-B // tb)

        kernel = functools.partial(_focal_kernel, batch=B)

        partial = pl.pallas_call(
            kernel,
            out_shape=jax.ShapeDtypeStruct((num_b_tiles, 8, 128), jnp.float32),
            grid=(num_b_tiles, num_c_tiles),
            in_specs=[
                pl.BlockSpec((tb, 1), lambda i, j: (i, 0)),
                pl.BlockSpec((tb, tc), lambda i, j: (i, j)),
            ],
            out_specs=pl.BlockSpec((1, 8, 128), lambda i, j: (i, 0, 0)),
            scratch_shapes=[
                pltpu.VMEM((tb, 1), jnp.float32),   # running max
                pltpu.VMEM((tb, 1), jnp.float32),   # running (rescaled) sum
                pltpu.VMEM((tb, 1), jnp.float32),   # running selected logit
            ],
            compiler_params=pltpu.CompilerParams(
                dimension_semantics=("parallel", "arbitrary"),
                vmem_limit_bytes=cfg["vmem_limit"],
            ),
        )(tgt, outputs)

        # reduction='mean' + focal modulation: 3 scalar ops in plain JAX
        logp = jnp.sum(partial[:, 0, 0]) / jnp.float32(B)
        p = jnp.exp(-logp)
        return (1.0 - p) ** gamma * logp

    return apply


def _reference(labels, outputs, index, gamma=GAMMA):
    """Pure-JAX reference mirroring the PyTorch forward."""
    conf = labels[index]
    tgt = jnp.argmax(conf, axis=1)
    logz = jax.nn.logsumexp(outputs.astype(jnp.float32), axis=1)
    nll = logz - jnp.take_along_axis(
        outputs.astype(jnp.float32), tgt[:, None], axis=1
    )[:, 0]
    logp = jnp.mean(nll)
    p = jnp.exp(-logp)
    return (1.0 - p) ** gamma * logp


if __name__ == "__main__":
    key = jax.random.PRNGKey(0)
    k1, k2, k3 = jax.random.split(key, 3)

    N, B, C = 16, 8, 32
    labels = jax.random.uniform(k1, (N, C), dtype=jnp.float32)     # soft labels
    outputs = jax.random.normal(k2, (B, C), dtype=jnp.float32)     # logits
    index = jax.random.randint(k3, (B,), 0, N, dtype=jnp.int32)    # batch -> label rows

    loss_fn = focal_loss(labels)
    loss = jax.block_until_ready(loss_fn(outputs, index))

    ref = jax.block_until_ready(_reference(labels, outputs, index))
    np.testing.assert_allclose(np.asarray(loss), np.asarray(ref), rtol=1e-5, atol=1e-6)

    print("KERNEL_OK")
</pallas_src>

<mosaic_0001>
module attributes {stable_mosaic.version = 11 : i64} {
  func.func @_focal_kernel(%arg0: i32, %arg1: i32, %arg2: memref<8x1xi32, #tpu.memory_space<vmem>>, %arg3: memref<8x128xf32, #tpu.memory_space<vmem>>, %arg4: memref<1x8x128xf32, #tpu.memory_space<vmem>>, %arg5: memref<8x1xf32, #tpu.memory_space<vmem>>, %arg6: memref<8x1xf32, #tpu.memory_space<vmem>>, %arg7: memref<8x1xf32, #tpu.memory_space<vmem>>) attributes {dimension_semantics = [#tpu.dimension_semantics<parallel>, #tpu.dimension_semantics<arbitrary>], iteration_bounds = array<i64: 1, 1>, scalar_prefetch = 0 : i64, scratch_operands = 3 : i64, tpu.core_type = #tpu.core_type<tc>, window_params = [{transform_indices = @transform_0, window_bounds = array<i64: 8, 1>}, {transform_indices = @transform_1, window_bounds = array<i64: 8, 128>}, {transform_indices = @transform_2, window_bounds = array<i64: 1, 8, 128>}]} {
    %c0 = arith.constant 0 : index
    %c0_0 = arith.constant 0 : index
    %0 = vector.load %arg3[%c0, %c0_0] : memref<8x128xf32, #tpu.memory_space<vmem>>, vector<8x128xf32>
    %c0_1 = arith.constant 0 : index
    %c0_2 = arith.constant 0 : index
    %1 = vector.load %arg2[%c0_1, %c0_2] : memref<8x1xi32, #tpu.memory_space<vmem>>, vector<8x1xi32>
    %c0_i32 = arith.constant 0 : i32
    %2 = arith.cmpi eq, %arg1, %c0_i32 : i32
    %3 = arith.extui %2 : i1 to i32
    %c0_i32_3 = arith.constant 0 : i32
    %4 = arith.cmpi ne, %3, %c0_i32_3 : i32
    scf.if %4 {
      %cst_21 = arith.constant 0xFF800000 : f32
      %37 = vector.broadcast %cst_21 : f32 to vector<8x1xf32>
      %c0_22 = arith.constant 0 : index
      %c0_23 = arith.constant 0 : index
      %38 = vector.load %arg5[%c0_22, %c0_23] : memref<8x1xf32, #tpu.memory_space<vmem>>, vector<8x1xf32>
      tpu.vector_store %arg5[%c0_22, %c0_23], %37 {strides = array<i32>} : memref<8x1xf32, #tpu.memory_space<vmem>>, vector<8x1xf32>,
      %cst_24 = arith.constant 0.000000e+00 : f32
      %39 = vector.broadcast %cst_24 : f32 to vector<8x1xf32>
      %c0_25 = arith.constant 0 : index
      %c0_26 = arith.constant 0 : index
      %40 = vector.load %arg6[%c0_25, %c0_26] : memref<8x1xf32, #tpu.memory_space<vmem>>, vector<8x1xf32>
      tpu.vector_store %arg6[%c0_25, %c0_26], %39 {strides = array<i32>} : memref<8x1xf32, #tpu.memory_space<vmem>>, vector<8x1xf32>,
      %cst_27 = arith.constant 0.000000e+00 : f32
      %41 = vector.broadcast %cst_27 : f32 to vector<8x1xf32>
      %c0_28 = arith.constant 0 : index
      %c0_29 = arith.constant 0 : index
      %42 = vector.load %arg7[%c0_28, %c0_29] : memref<8x1xf32, #tpu.memory_space<vmem>>, vector<8x1xf32>
      tpu.vector_store %arg7[%c0_28, %c0_29], %41 {strides = array<i32>} : memref<8x1xf32, #tpu.memory_space<vmem>>, vector<8x1xf32>,
    } else {
    }
    %5 = tpu.iota {dimensions = array<i32: 1>} : vector<8x128xi32>
    %c128_i32 = arith.constant 128 : i32
    %6 = arith.muli %arg1, %c128_i32 : i32
    %7 = vector.broadcast %6 : i32 to vector<8x128xi32>
    %8 = arith.addi %5, %7 : vector<8x128xi32>
    %c0_4 = arith.constant 0 : index
    %c0_5 = arith.constant 0 : index
    %9 = vector.load %arg7[%c0_4, %c0_5] : memref<8x1xf32, #tpu.memory_space<vmem>>, vector<8x1xf32>
    %10 = vector.broadcast %1 : vector<8x1xi32> to vector<8x128xi32>
    %11 = arith.cmpi eq, %8, %10 : vector<8x128xi32>
    %cst = arith.constant 0.000000e+00 : f32
    %12 = vector.broadcast %cst : f32 to vector<8x128xf32>
    %13 = arith.select %11, %0, %12 : vector<8x128xi1>, vector<8x128xf32>
    %cst_6 = arith.constant dense<0.000000e+00> : vector<8xf32>
    %14 = vector.multi_reduction <add>, %13, %cst_6 [1] : vector<8x128xf32> to vector<8xf32>
    %15 = vector.shape_cast %14 : vector<8xf32> to vector<8x1xf32>
    %16 = arith.addf %9, %15 : vector<8x1xf32>
    %c0_7 = arith.constant 0 : index
    %c0_8 = arith.constant 0 : index
    %17 = vector.load %arg7[%c0_7, %c0_8] : memref<8x1xf32, #tpu.memory_space<vmem>>, vector<8x1xf32>
    tpu.vector_store %arg7[%c0_7, %c0_8], %16 {strides = array<i32>} : memref<8x1xf32, #tpu.memory_space<vmem>>, vector<8x1xf32>,
    %c0_9 = arith.constant 0 : index
    %c0_10 = arith.constant 0 : index
    %18 = vector.load %arg5[%c0_9, %c0_10] : memref<8x1xf32, #tpu.memory_space<vmem>>, vector<8x1xf32>
    %cst_11 = arith.constant dense<0xFF800000> : vector<8xf32>
    %19 = vector.multi_reduction <maximumf>, %0, %cst_11 [1] : vector<8x128xf32> to vector<8xf32>
    %20 = vector.shape_cast %19 : vector<8xf32> to vector<8x1xf32>
    %21 = arith.maximumf %18, %20 : vector<8x1xf32>
    %c0_12 = arith.constant 0 : index
    %c0_13 = arith.constant 0 : index
    %22 = vector.load %arg6[%c0_12, %c0_13] : memref<8x1xf32, #tpu.memory_space<vmem>>, vector<8x1xf32>
    %23 = arith.subf %18, %21 : vector<8x1xf32>
    %24 = math.exp %23 : vector<8x1xf32>
    %25 = arith.mulf %22, %24 : vector<8x1xf32>
    %26 = vector.broadcast %21 : vector<8x1xf32> to vector<8x128xf32>
    %27 = arith.subf %0, %26 : vector<8x128xf32>
    %28 = math.exp %27 : vector<8x128xf32>
    %cst_14 = arith.constant dense<0.000000e+00> : vector<8xf32>
    %29 = vector.multi_reduction <add>, %28, %cst_14 [1] : vector<8x128xf32> to vector<8xf32>
    %30 = vector.shape_cast %29 : vector<8xf32> to vector<8x1xf32>
    %31 = arith.addf %25, %30 : vector<8x1xf32>
    %c0_15 = arith.constant 0 : index
    %c0_16 = arith.constant 0 : index
    %32 = vector.load %arg6[%c0_15, %c0_16] : memref<8x1xf32, #tpu.memory_space<vmem>>, vector<8x1xf32>
    tpu.vector_store %arg6[%c0_15, %c0_16], %31 {strides = array<i32>} : memref<8x1xf32, #tpu.memory_space<vmem>>, vector<8x1xf32>,
    %c0_17 = arith.constant 0 : index
    %c0_18 = arith.constant 0 : index
    %33 = vector.load %arg5[%c0_17, %c0_18] : memref<8x1xf32, #tpu.memory_space<vmem>>, vector<8x1xf32>
    tpu.vector_store %arg5[%c0_17, %c0_18], %21 {strides = array<i32>} : memref<8x1xf32, #tpu.memory_space<vmem>>, vector<8x1xf32>,
    %c0_i32_19 = arith.constant 0 : i32
    %34 = arith.cmpi eq, %arg1, %c0_i32_19 : i32
    %35 = arith.extui %34 : i1 to i32
    %c0_i32_20 = arith.constant 0 : i32
    %36 = arith.cmpi ne, %35, %c0_i32_20 : i32
    scf.if %36 {
      %c0_21 = arith.constant 0 : index
      %c0_22 = arith.constant 0 : index
      %37 = vector.load %arg5[%c0_21, %c0_22] : memref<8x1xf32, #tpu.memory_space<vmem>>, vector<8x1xf32>
      %c0_23 = arith.constant 0 : index
      %c0_24 = arith.constant 0 : index
      %38 = vector.load %arg6[%c0_23, %c0_24] : memref<8x1xf32, #tpu.memory_space<vmem>>, vector<8x1xf32>
      %39 = math.log %38 : vector<8x1xf32>
      %40 = arith.addf %37, %39 : vector<8x1xf32>
      %c0_25 = arith.constant 0 : index
      %c0_26 = arith.constant 0 : index
      %41 = vector.load %arg7[%c0_25, %c0_26] : memref<8x1xf32, #tpu.memory_space<vmem>>, vector<8x1xf32>
      %42 = arith.subf %40, %41 : vector<8x1xf32>
      %43 = tpu.iota {dimensions = array<i32: 0>} : vector<8x1xi32>
      %c8_i32 = arith.constant 8 : i32
      %44 = arith.muli %arg0, %c8_i32 : i32
      %45 = vector.broadcast %44 : i32 to vector<8x1xi32>
      %46 = arith.addi %43, %45 : vector<8x1xi32>
      %c8_i32_27 = arith.constant 8 : i32
      %47 = vector.broadcast %c8_i32_27 : i32 to vector<8x1xi32>
      %48 = arith.cmpi slt, %46, %47 : vector<8x1xi32>
      %cst_28 = arith.constant 0.000000e+00 : f32
      %49 = vector.broadcast %cst_28 : f32 to vector<8x1xf32>
      %50 = arith.select %48, %42, %49 : vector<8x1xi1>, vector<8x1xf32>
      %51 = vector.shape_cast %50 : vector<8x1xf32> to vector<1x8x1xf32>
      %cst_29 = arith.constant dense<0.000000e+00> : vector<1xf32>
      %52 = vector.multi_reduction <add>, %51, %cst_29 [1, 2] : vector<1x8x1xf32> to vector<1xf32>
      %53 = vector.shape_cast %52 : vector<1xf32> to vector<1x1x1xf32>
      %54 = vector.extract %53[0, 0, 0] : f32 from vector<1x1x1xf32>
      %55 = vector.broadcast %54 : f32 to vector<1x1x1xf32>
      %56 = vector.shape_cast %55 : vector<1x1x1xf32> to vector<1x1x1xf32>
      %57 = vector.broadcast %56 : vector<1x1x1xf32> to vector<1x8x128xf32>
      %c0_30 = arith.constant 0 : index
      %c0_31 = arith.constant 0 : index
      %c0_32 = arith.constant 0 : index
      %58 = vector.load %arg4[%c0_30, %c0_31, %c0_32] : memref<1x8x128xf32, #tpu.memory_space<vmem>>, vector<1x8x128xf32>
      tpu.vector_store %arg4[%c0_30, %c0_31, %c0_32], %57 {strides = array<i32>} : memref<1x8x128xf32, #tpu.memory_space<vmem>>, vector<1x8x128xf32>,
    } else {
    }
    return
  }
  func.func @transform_0(%arg0: i32, %arg1: i32) -> (i32, i32) {
    %c0_i32 = arith.constant 0 : i32
    %c0_i32_0 = arith.constant 0 : i32
    return %arg0, %c0_i32 : i32, i32
  }
  func.func @transform_1(%arg0: i32, %arg1: i32) -> (i32, i32) {
    %c0_i32 = arith.constant 0 : i32
    return %arg0, %arg1 : i32, i32
  }
  func.func @transform_2(%arg0: i32, %arg1: i32) -> (i32, i32, i32) {
    %c0_i32 = arith.constant 0 : i32
    %c0_i32_0 = arith.constant 0 : i32
    %c0_i32_1 = arith.constant 0 : i32
    return %arg0, %c0_i32, %c0_i32_0 : i32, i32, i32
  }
}

</mosaic_0001>

<llo_original>
// kernel: tpu_custom_call.1
$region0: #{tpu_custom_call.1}
  #allocation0 [shape = 'u32[]', space=smem, size = 0x4, offset = 0x4, fixed_abs, tag = 'smem constant byte address 0x4 - core index']
  #allocation1 [shape = 'u32[144,128]{1,0:T(1,128)}', space=vmem, size = 0x12000, scoped, tag = 'internal scratch']
  #allocation2 [shape = 'f32[8,1]{1,0:T(8,128)}', space=vmem, size = 0x1000, scoped, tag = 'scratch operand']
  #allocation3 [shape = 'f32[8,1]{1,0:T(8,128)}', space=vmem, size = 0x1000, scoped, tag = 'scratch operand']
  #allocation4 [shape = 'f32[8,1]{1,0:T(8,128)}', space=vmem, size = 0x1000, scoped, tag = 'scratch operand']
  %s0 = inlined_call_operand.vmem [shape: s32[8,1], index: 0, kind: input, shape index: {}]
  %s1 = inlined_call_operand.vmem [shape: f32[8,128], index: 1, kind: input, shape index: {}]
  %s2 = inlined_call_operand.hbm [shape: f32[1,8,128], index: 2, kind: output, shape index: {}]
  %s3 = sld [smem:[#allocation0]]
  $region26: #{tpu_custom_call.1} parent=0
    _
  %s5 = ssub.s32 1, %s3
  %s6 = scalar_select 0, %s5, %s3
  $region1: #{tpu_custom_call.1} parent=0
    #allocation5 [shape = 'u8[4096]{0}', space=vmem, size = 0x1000, scoped, tag = 'output window, operand 0, single buffered']
    #allocation6 [shape = 's32[1]{0}', space=sflag, size = 0x4, scoped, tag = 'scoped memory for tpu_custom_call.1']
    %7 = vsyncpa [#allocation6], 0
    // Predicated region
    $region2: #{tpu_custom_call.1} parent=1 // pred_check
      _
    $region3: #{tpu_custom_call.1} parent=1 // pred_check_branch
      %9 = sbr.rel (0) target = $region5
    $region4: #{tpu_custom_call.1} parent=1 // pred_region
      _
    $region5: #{tpu_custom_call.1} parent=1 // pred_fallthru
      _
    // Predicated region
    $region6: #{tpu_custom_call.1} parent=1 // pred_check
      _
    $region7: #{tpu_custom_call.1} parent=1 // pred_check_branch
      %11 = sbr.rel (0) target = $region9
    $region8: #{tpu_custom_call.1} parent=1 // pred_region
      _
    $region9: #{tpu_custom_call.1} parent=1 // pred_fallthru
      _
    %v12 = vld [vmem:[%s1] sm:$0xff]
    %v13 = vld [vmem:[%s0] sm:$0xff]
    %p14 = scmp.eq.s32.totalorder 0, 0
    // Predicated region
    $region10: #{tpu_custom_call.1} parent=1 // pred_check
      %p15 = pneg %p14
    $region11: #{tpu_custom_call.1} parent=1 // pred_check_branch
      %17 = sbr.rel (%p15) target = $region13
    $region12: #{tpu_custom_call.1} parent=1 // pred_region
      %vm18 = vcmask 7168
      %19 = vst.msk [vmem:[#allocation2] sm:$0xff] %vm18, -inf
      %20 = vst.msk [vmem:[#allocation3] sm:$0xff] %vm18, 0.0
      %21 = vst.msk [vmem:[#allocation4] sm:$0xff] %vm18, 0.0
    $region13: #{tpu_custom_call.1} parent=1 // pred_fallthru
      _
    %v22 = vlaneseq
    %v23 = vand.u32 %v22, 127
    %s24 = smul.u32 0, 128
    %v25 = vstv %s24
    %v26 = vadd.s32 %v23, %v25
    %v27 = vld [vmem:[#allocation4] sm:$0xff]
    %28 = vset.pattern.permute.xlu0 0
    %29 = vperm.xlu0 %28, %v13
    %v30 = vpop.permute.xlu0 %29
    %vm31 = vcmp.eq.s32.totalorder %v26, %v30
    %v32 = vsel %vm31, %v12, 0.0
    %33 = vadd.xlane.f32.xlu0 %v32
    %v34 = vpop.xlane.xlu0 %33
    %v35 = vadd.f32 %v27, %v34
    %vm36 = vcmask 7168
    %37 = vst.msk [vmem:[#allocation4] sm:$0xff] %vm36, %v35
    %v38 = vld [vmem:[#allocation2] sm:$0xff]
    %39 = vmax.xlane.f32.xlu0 %v12
    %v40 = vpop.xlane.xlu0 %39
    %v41 = vmax.f32 %v38, %v40
    %v42 = vld [vmem:[#allocation3] sm:$0xff]
    %v43 = vsub.f32 %v38, %v41
    %v44 = vmul.f32 %v43, 1.442695
    %v45 = vpow.pop %v44
    %v46 = vmul.f32 %v42, %v45
    %48 = vset.pattern.permute.xlu0 0
    %49 = vperm.xlu0 %48, %v41
    %v50 = vpop.permute.xlu0 %49
    %v52 = vsub.f32 %v12, %v50
    %v53 = vmul.f32 %v52, 1.442695
    %v54 = vpow.pop %v53
    %55 = vadd.xlane.f32.xlu0 %v54
    %v56 = vpop.xlane.xlu0 %55
    %v57 = vadd.f32 %v46, %v56
    %58 = vst.msk [vmem:[#allocation3] sm:$0xff] %vm36, %v57
    %59 = vst.msk [vmem:[#allocation2] sm:$0xff] %vm36, %v41
    // Predicated region
    $region14: #{tpu_custom_call.1} parent=1 // pred_check
      %p60 = pneg %p14
    $region15: #{tpu_custom_call.1} parent=1 // pred_check_branch
      %62 = sbr.rel (%p60) target = $region17
    $region16: #{tpu_custom_call.1} parent=1 // pred_region
      %v63 = vld [vmem:[#allocation2] sm:$0xff]
      %v64 = vld [vmem:[#allocation3] sm:$0xff]
      %v65 = vlog2.pop %v64
      %v66 = vmul.f32 %v65, 0.6931472
      %v67 = vadd.f32 %v63, %v66
      %v68 = vld [vmem:[#allocation4] sm:$0xff]
      %v69 = vsub.f32 %v67, %v68
      %v70 = vlaneseq
      %v71 = vshrl.u32 %v70, 7
      %s72 = smul.u32 0, 8
      %v73 = vstv %s72
      %v74 = vadd.s32 %v71, %v73
      %vm75 = vcmp.lt.s32.totalorder %v74, 8
      %v76 = vsel %vm75, %v69, 0.0
      %v77 = vsel %vm36, %v76, 0.0
      %78 = vadd.xlane.f32.xlu0 %v77
      %v79 = vpop.xlane.xlu0 %78
      %v80 = vrot.slane %v79, 4
      %v81 = vadd.f32 %v79, %v80
      %v82 = vrot.slane %v81, 2
      %v83 = vadd.f32 %v81, %v82
      %v84 = vrot.slane %v83, 1
      %v85 = vadd.f32 %v83, %v84
      %s86 = vtos %v85
      %v87 = vstv %s86
      %88 = vst [vmem:[#allocation5] sm:$0xff] %v87
    $region17: #{tpu_custom_call.1} parent=1 // pred_fallthru
      _
    // Predicated region
    $region18: #{tpu_custom_call.1} parent=1 // pred_check
      _
    $region19: #{tpu_custom_call.1} parent=1 // pred_check_branch
      %90 = sbr.rel (0) target = $region21
    $region20: #{tpu_custom_call.1} parent=1 // pred_region
      %s92 = ssub.s32 128, 128
      %93 = vsyncadd [#allocation6], %s92
      %s95 = sshll.u32 [#allocation5], 4
      %s96 = int_to_ptr.vmem [resolvable:$true] %s95
      %98 = dma.vmem_to_hbm [thread:$0]  %s96, 128, %s2, [#allocation6]
    $region21: #{tpu_custom_call.1} parent=1 // pred_fallthru
      _
    // Predicated region
    $region22: #{tpu_custom_call.1} parent=1 // pred_check
      _
    $region23: #{tpu_custom_call.1} parent=1 // pred_check_branch
      %100 = sbr.rel (0) target = $region25
    $region24: #{tpu_custom_call.1} parent=1 // pred_region
      %101 = dma.done [#allocation6], 128
    $region25: #{tpu_custom_call.1} parent=1 // pred_fallthru
      _
    %102 = vsyncpa [#allocation6], 1

</llo_original>
